<compile_context>
chip_gen: v5e
topology: v5e:2x2
jax: 0.10.0
libtpu: 0.0.40
codegen_flags: <defaults>
</compile_context>

<pallas_src>
import functools

import jax
import jax.numpy as jnp
import numpy as np
from jax.experimental import pallas as pl
from jax.experimental.pallas import tpu as pltpu


def _round_up(x, m):
    return (x + m - 1) // m * m


def _pad2(x, rows, cols):
    pr, pc = rows - x.shape[0], cols - x.shape[1]
    if pr or pc:
        x = jnp.pad(x, ((0, pr), (0, pc)))
    return x


def _vmem_capacity_bytes():
    # Generation-aware VMEM budget; fall back to the smallest (v7x: 64 MiB/TC).
    try:
        return int(pltpu.get_tpu_info().vmem_capacity_bytes)
    except Exception:
        return 64 * 1024 * 1024


def _pick_tm(np_, cands=(512, 384, 256, 128)):
    divs = [c for c in cands if c <= np_ and np_ % c == 0]
    if not divs:
        return np_
    # Prefer the largest TM that still leaves >= 2 row tiles (v7x dual-TC split).
    multi = [c for c in divs if np_ // c >= 2]
    return multi[0] if multi else divs[-1]


def _pick_tk(np_, cands=(2048, 1024, 512, 256, 128)):
    for c in cands:
        if c <= np_ and np_ % c == 0:
            return c
    return np_


# ---------------- kernel 1: feature transform  seq_fts = seq @ W^T ----------------
def linear_kernel(seq_ref, w_ref, out_ref):
    out_ref[...] = jnp.dot(
        seq_ref[...].astype(jnp.bfloat16),
        w_ref[...].astype(jnp.bfloat16),
        preferred_element_type=jnp.float32,
    ).astype(out_ref.dtype)


# ------------- kernel 2: out = PReLU(adj @ seq_fts + bias), tiled (i, k) -----------
def gcn_agg_kernel(adj_ref, fts_ref, b_ref, alpha_ref, out_ref, *, tk, fts_resident):
    k = pl.program_id(1)

    @pl.when(k == 0)
    def _():
        out_ref[...] = jnp.zeros_like(out_ref)

    # bf16 cast of the f32 adj tile happens in-kernel (free under the DMA bottleneck;
    # avoids a whole extra HBM pass over the N x N matrix in the wrapper).
    adj_tile = adj_ref[...].astype(jnp.bfloat16)

    if fts_resident:
        # seq_fts is fully VMEM-resident; slice the current K block.
        off = pl.multiple_of(k * tk, 128)
        fts_tile = fts_ref[pl.ds(off, tk), :]
    else:
        fts_tile = fts_ref[...]

    # Accumulate straight into the VMEM-resident f32 output tile (MXU f32 acc).
    out_ref[...] += jnp.dot(adj_tile, fts_tile, preferred_element_type=jnp.float32)

    @pl.when(k == pl.num_programs(1) - 1)
    def _():
        # f32 epilogue: bias add + PReLU, in place.
        out = out_ref[...] + b_ref[...]
        alpha = alpha_ref[0]
        out_ref[...] = jnp.where(out > 0, out, alpha * out)


def gcn_forward(seq, adj, w_t, bias, alpha):
    """seq: (N, in_ft), adj: (N, N), w_t: (in_ft, out_ft) (pre-transposed Linear
    weight), bias: (out_ft,), alpha: scalar PReLU slope.  Returns (N, out_ft) f32."""
    N, in_ft = seq.shape
    out_ft = w_t.shape[1]

    # ---- lane-dense TPU shapes (last dims multiples of 128); pad only if needed ----
    Np = _round_up(N, 128)
    in_ft_p = _round_up(in_ft, 128)
    out_ft_p = _round_up(out_ft, 128)

    TM = _pick_tm(Np)
    TK = _pick_tk(Np)

    seq_p = _pad2(seq.astype(jnp.float32), Np, in_ft_p)
    adj_p = _pad2(adj.astype(jnp.float32), Np, Np)      # stays f32; cast per tile in kernel
    w_p = _pad2(w_t.astype(jnp.float32), in_ft_p, out_ft_p)
    b_p = jnp.pad(bias.astype(jnp.float32), (0, out_ft_p - out_ft)).reshape(1, out_ft_p)
    a_smem = jnp.asarray(alpha, jnp.float32).reshape(1)

    # ---- step 1: seq_fts = seq @ W^T (hoisted out of the adj-tiled loop) ----
    seq_fts = pl.pallas_call(
        linear_kernel,
        out_shape=jax.ShapeDtypeStruct((Np, out_ft_p), jnp.bfloat16),
        grid_spec=pltpu.PrefetchScalarGridSpec(
            num_scalar_prefetch=0,
            grid=(Np // TM,),
            in_specs=[
                pl.BlockSpec((TM, in_ft_p), lambda i: (i, 0)),
                pl.BlockSpec((in_ft_p, out_ft_p), lambda i: (0, 0)),
            ],
            out_specs=pl.BlockSpec((TM, out_ft_p), lambda i: (i, 0)),
        ),
        compiler_params=pltpu.CompilerParams(dimension_semantics=("parallel",)),
    )(seq_p, w_p)

    # ---- step 2: out = PReLU(adj @ seq_fts + bias), tiled over (rows, K) ----
    n_rows = Np // TM
    n_k = Np // TK

    vmem_cap = _vmem_capacity_bytes()
    fts_bytes = Np * out_ft_p * 2
    # Keep seq_fts fully resident when it fits comfortably (<= 1/4 of this chip's VMEM);
    # otherwise fall back to streaming K-slices.
    fts_resident = fts_bytes <= vmem_cap // 4

    adj_buf = 2 * TM * TK * 4                 # f32 adj tiles, double buffered
    out_buf = 2 * TM * out_ft_p * 4           # f32 output tiles, double buffered
    bias_buf = 2 * out_ft_p * 4
    fts_buf = (2 * fts_bytes) if fts_resident else (2 * TK * out_ft_p * 2)
    vmem_est = adj_buf + out_buf + bias_buf + fts_buf
    vmem_limit = int(min(vmem_cap * 3 // 4, max(vmem_est + (8 << 20), 16 << 20)))

    if fts_resident:
        fts_spec = pl.BlockSpec((Np, out_ft_p), lambda i, k: (0, 0))   # one DMA total
    else:
        fts_spec = pl.BlockSpec((TK, out_ft_p), lambda i, k: (k, 0))   # stream K-slices

    cost = pl.CostEstimate(
        flops=2 * Np * Np * out_ft_p,
        transcendentals=0,
        bytes_accessed=(adj_p.size * 4 + seq_fts.size * 2
                        + Np * out_ft_p * 4 + out_ft_p * 4),
    )

    kernel = functools.partial(gcn_agg_kernel, tk=TK, fts_resident=fts_resident)

    out_p = pl.pallas_call(
        kernel,
        out_shape=jax.ShapeDtypeStruct((Np, out_ft_p), jnp.float32),
        grid_spec=pltpu.PrefetchScalarGridSpec(
            num_scalar_prefetch=0,
            grid=(n_rows, n_k),
            in_specs=[
                pl.BlockSpec((TM, TK), lambda i, k: (i, k)),           # adj tile (f32)
                fts_spec,                                              # seq_fts (bf16)
                pl.BlockSpec((1, out_ft_p), lambda i, k: (0, 0)),      # bias
                pl.BlockSpec(memory_space=pltpu.MemorySpace.SMEM),     # alpha scalar
            ],
            out_specs=pl.BlockSpec((TM, out_ft_p), lambda i, k: (i, 0)),
        ),
        compiler_params=pltpu.CompilerParams(
            dimension_semantics=("parallel", "arbitrary"),
            vmem_limit_bytes=vmem_limit),
        cost_estimate=cost,
    )(adj_p, seq_fts, b_p, a_smem)

    # Slice away padding.
    return out_p[:N, :out_ft]


if __name__ == "__main__":
    # Small, deterministic problem that still exercises multi-tile rows and the
    # K accumulation loop: N=384 nodes, in_ft=32, out_ft=64.
    N, in_ft, out_ft = 384, 32, 64
    key = jax.random.PRNGKey(0)
    k_seq, k_adj, k_w = jax.random.split(key, 3)

    seq = jax.random.normal(k_seq, (N, in_ft), dtype=jnp.float32)
    # Row-normalized random adjacency (dense stand-in for the sparse adj).
    adj_raw = (jax.random.uniform(k_adj, (N, N)) > 0.9).astype(jnp.float32)
    adj_raw = adj_raw + jnp.eye(N, dtype=jnp.float32)
    adj = adj_raw / jnp.sum(adj_raw, axis=1, keepdims=True)

    # Parameters (deterministic init mirroring reset_parameters):
    #   Linear weight: xavier_normal_ with gain=1.414, stored transposed (in_ft, out_ft)
    gain = 1.414
    std = gain * np.sqrt(2.0 / (in_ft + out_ft))
    w_t = std * jax.random.normal(k_w, (in_ft, out_ft), dtype=jnp.float32)
    #   bias filled with 0.0
    bias = jnp.zeros((out_ft,), dtype=jnp.float32)
    #   PReLU default alpha = 0.25
    alpha = 0.25

    out = gcn_forward(seq, adj, w_t, bias, alpha)
    out = jax.block_until_ready(out)

    # Reference check in plain JAX (f32 path; kernel uses bf16 MXU operands with
    # f32 accumulation, so tolerance is loosened accordingly).
    ref = adj @ (seq @ w_t) + bias
    ref = jnp.where(ref > 0, ref, alpha * ref)
    np.testing.assert_allclose(np.asarray(out), np.asarray(ref),
                               rtol=2e-2, atol=2e-2)

    print("KERNEL_OK")
</pallas_src>

<mosaic_0001>
module attributes {stable_mosaic.version = 11 : i64} {
  func.func @linear_kernel(%arg0: i32, %arg1: memref<128x128xf32, #tpu.memory_space<vmem>>, %arg2: memref<128x128xf32, #tpu.memory_space<vmem>>, %arg3: memref<128x128xbf16, #tpu.memory_space<vmem>>) attributes {dimension_semantics = [#tpu.dimension_semantics<parallel>], iteration_bounds = array<i64: 3>, scalar_prefetch = 0 : i64, scratch_operands = 0 : i64, tpu.core_type = #tpu.core_type<tc>, window_params = [{transform_indices = @transform_0, window_bounds = array<i64: 128, 128>}, {pipeline_mode = #tpu.pipeline_mode<synchronous>, transform_indices = @transform_1, window_bounds = array<i64: 128, 128>}, {transform_indices = @transform_2, window_bounds = array<i64: 128, 128>}]} {
    %c0 = arith.constant 0 : index
    %c0_0 = arith.constant 0 : index
    %0 = vector.load %arg1[%c0, %c0_0] : memref<128x128xf32, #tpu.memory_space<vmem>>, vector<128x128xf32>
    %1 = arith.truncf %0 : vector<128x128xf32> to vector<128x128xbf16>
    %c0_1 = arith.constant 0 : index
    %c0_2 = arith.constant 0 : index
    %2 = vector.load %arg2[%c0_1, %c0_2] : memref<128x128xf32, #tpu.memory_space<vmem>>, vector<128x128xf32>
    %3 = arith.truncf %2 : vector<128x128xf32> to vector<128x128xbf16>
    %cst = arith.constant dense<0.000000e+00> : vector<128x128xf32>
    %4 = tpu.matmul %1, %3, %cst {dimension_numbers = #tpu.dot_dimension_numbers<[1], [0], [0], [1], [0, 0, 1, 1], [], []>} : vector<128x128xbf16>, vector<128x128xbf16>, vector<128x128xf32> -> vector<128x128xf32>
    %5 = arith.truncf %4 : vector<128x128xf32> to vector<128x128xbf16>
    %c0_3 = arith.constant 0 : index
    %c0_4 = arith.constant 0 : index
    %6 = vector.load %arg3[%c0_3, %c0_4] : memref<128x128xbf16, #tpu.memory_space<vmem>>, vector<128x128xbf16>
    tpu.vector_store %arg3[%c0_3, %c0_4], %5 {strides = array<i32>} : memref<128x128xbf16, #tpu.memory_space<vmem>>, vector<128x128xbf16>,
    return
  }
  func.func @transform_0(%arg0: i32) -> (i32, i32) {
    %c0_i32 = arith.constant 0 : i32
    %c0_i32_0 = arith.constant 0 : i32
    return %arg0, %c0_i32 : i32, i32
  }
  func.func @transform_1(%arg0: i32) -> (i32, i32) {
    %c0_i32 = arith.constant 0 : i32
    %c0_i32_0 = arith.constant 0 : i32
    %c0_i32_1 = arith.constant 0 : i32
    return %c0_i32, %c0_i32_0 : i32, i32
  }
  func.func @transform_2(%arg0: i32) -> (i32, i32) {
    %c0_i32 = arith.constant 0 : i32
    %c0_i32_0 = arith.constant 0 : i32
    return %arg0, %c0_i32 : i32, i32
  }
}

</mosaic_0001>

<llo_original>
// kernel: tpu_custom_call.1
$region0: #{tpu_custom_call.1}
  #allocation0 [shape = 'u32[]', space=smem, size = 0x4, offset = 0x4, fixed_abs, tag = 'smem constant byte address 0x4 - core index']
  #allocation1 [shape = 'u32[72,128]{1,0:T(1,128)}', space=vmem, size = 0x9000, scoped, tag = 'internal scratch']
  %s0 = inlined_call_operand.hbm [shape: f32[384,128], index: 0, kind: input, shape index: {}]
  %s1 = inlined_call_operand.hbm [shape: f32[128,128], index: 1, kind: input, shape index: {}]
  %s2 = inlined_call_operand.hbm [shape: bf16[384,128], index: 2, kind: output, shape index: {}]
  %s3 = sld [smem:[#allocation0]]
  $region49: #{tpu_custom_call.1} parent=0
    _
  %s5 = ssub.s32 1, %s3
  %s6 = scalar_select 0, %s5, %s3
  $region1: #{tpu_custom_call.1} parent=0
    #allocation2 [shape = 'u8[131072]{0}', space=vmem, size = 0x20000, scoped, tag = 'input window, operand 0']
    #allocation3 [shape = 's32[2]{0}', space=sflag, size = 0x8, scoped, tag = 'scoped memory for tpu_custom_call.1']
    #allocation4 [shape = 's32[2]{0}', space=sflag, size = 0x8, scoped, tag = 'scoped memory for tpu_custom_call.1']
    #allocation5 [shape = 'u8[65536]{0}', space=vmem, size = 0x10000, scoped, tag = 'input window, operand 1, single buffered']
    #allocation6 [shape = 's32[1]{0}', space=sflag, size = 0x4, scoped, tag = 'scoped memory for tpu_custom_call.1']
    #allocation7 [shape = 'u8[65536]{0}', space=vmem, size = 0x10000, scoped, tag = 'output window, operand 0']
    %7 = vsyncpa [#allocation3], 0
    %s8 = scalar_lea.sflag [#allocation3], 1
    %9 = vsyncpa %s8, 0
    %10 = vsyncpa [#allocation6], 0
    %11 = vsyncpa [#allocation4], 0
    %s12 = scalar_lea.sflag [#allocation4], 1
    %13 = vsyncpa %s12, 0
    loop: start=0, step=1, limit=5
    $region2: #{tpu_custom_call.1} parent=1 // loop_pre_header
      _
    $region3: #{tpu_custom_call.1} parent=1 // loop_header
      %s15 = sphi 0, %s19
      %p16 = scmp.ge.s32.totalorder %s15, 5
      %s25 = sphi 0, %s27
      %s28 = sphi 0, %s25
      %s29 = sphi 0, %s28
      %s45 = sphi 0, %s29
      %s49 = sphi 0, %s49
      %s51 = sphi 0, %s49
      %s52 = sphi 0, %s51
      %s66 = sphi 0, %s52
      %s72 = sphi 0, %s74
      %s75 = sphi 0, %s72
      %s76 = sphi 0, %s75
      %s92 = sphi 0, %s76
    $region4: #{tpu_custom_call.1} parent=1 // loop_header_branch
      %18 = sbr.rel (%p16) target = $region8
    $region5: #{tpu_custom_call.1} parent=1 // loop_body
      %s20 = ssub.s32 %s15, 1
      %s21 = ssub.s32 %s15, 2
      %s22 = sadd.s32 %s15, 1
      %s23 = ssub.s32 %s15, %s22
      %p24 = scmp.eq.s32.totalorder %s23, 0
      %s26 = sadd.s32 %s25, 1
      %s27 = scalar_select %p24, %s25, %s26
      %p30 = pneg %p24
      %p31 = scmp.eq.s32.totalorder %s15, 2
      %p32 = por %p30, %p31
      %p33 = scmp.ne.s32.totalorder %s25, %s28
      %p34 = scmp.eq.s32.totalorder %s15, 0
      %p35 = por %p33, %p34
      %p36 = scmp.ne.s32.totalorder %s25, %s28
      %p37 = scmp.eq.s32.totalorder %s20, 2
      %p38 = por %p36, %p37
      %p39 = scmp.ne.s32.totalorder %s28, %s29
      %p40 = scmp.eq.s32.totalorder %s20, 0
      %p41 = por %p39, %p40
      %p42 = scmp.ne.s32.totalorder %s28, %s29
      %p43 = scmp.eq.s32.totalorder %s21, 2
      %p44 = por %p42, %p43
      %p46 = scmp.ne.s32.totalorder %s29, %s45
      %p47 = scmp.eq.s32.totalorder %s21, 0
      %p48 = por %p46, %p47
      %s50 = sadd.s32 %s49, 1
      %p53 = scmp.eq.s32.totalorder %s15, 2
      %p54 = scmp.ne.s32.totalorder %s49, %s51
      %p55 = scmp.eq.s32.totalorder %s15, 0
      %p56 = por %p54, %p55
      %p57 = scmp.ne.s32.totalorder %s49, %s51
      %p58 = scmp.eq.s32.totalorder %s20, 2
      %p59 = por %p57, %p58
      %p60 = scmp.ne.s32.totalorder %s51, %s52
      %p61 = scmp.eq.s32.totalorder %s20, 0
      %p62 = por %p60, %p61
      %p63 = scmp.ne.s32.totalorder %s51, %s52
      %p64 = scmp.eq.s32.totalorder %s21, 2
      %p65 = por %p63, %p64
      %p67 = scmp.ne.s32.totalorder %s52, %s66
      %p68 = scmp.eq.s32.totalorder %s21, 0
      %p69 = por %p67, %p68
      %s70 = ssub.s32 %s15, %s22
      %p71 = scmp.eq.s32.totalorder %s70, 0
      %s73 = sadd.s32 %s72, 1
      %s74 = scalar_select %p71, %s72, %s73
      %p77 = pneg %p71
      %p78 = scmp.eq.s32.totalorder %s15, 2
      %p79 = por %p77, %p78
      %p80 = scmp.ne.s32.totalorder %s72, %s75
      %p81 = scmp.eq.s32.totalorder %s15, 0
      %p82 = por %p80, %p81
      %p83 = scmp.ne.s32.totalorder %s72, %s75
      %p84 = scmp.eq.s32.totalorder %s20, 2
      %p85 = por %p83, %p84
      %p86 = scmp.ne.s32.totalorder %s75, %s76
      %p87 = scmp.eq.s32.totalorder %s20, 0
      %p88 = por %p86, %p87
      %p89 = scmp.ne.s32.totalorder %s75, %s76
      %p90 = scmp.eq.s32.totalorder %s21, 2
      %p91 = por %p89, %p90
      %p93 = scmp.ne.s32.totalorder %s76, %s92
      %p94 = scmp.eq.s32.totalorder %s21, 0
      %p95 = por %p93, %p94
      %p96 = scmp.le.s32.totalorder 1, %s15
      %p97 = scmp.lt.s32.totalorder %s15, 4
      %p98 = pnand %p96, %p97
      %p99 = pneg %p98
      // Predicated region
      $region9: #{tpu_custom_call.1} parent=5 // pred_check
        _
      $region10: #{tpu_custom_call.1} parent=5 // pred_check_branch
        %101 = sbr.rel (%p98) target = $region12
      $region11: #{tpu_custom_call.1} parent=5 // pred_region
        %s102 = ssub.s32 %s15, 1
        // Predicated region
        $region13: #{tpu_custom_call.1} parent=11 // pred_check
          %p103 = pneg %p62
        $region14: #{tpu_custom_call.1} parent=11 // pred_check_branch
          %105 = sbr.rel (%p103) target = $region16
        $region15: #{tpu_custom_call.1} parent=11 // pred_region
          %107 = vsyncadd [#allocation6], 0
          %s108 = sshll.u32 %s1, 4
          %s109 = int_to_ptr.hbm [resolvable:$true] %s108
          %s110 = sshll.u32 [#allocation5], 4
          %s111 = int_to_ptr.vmem [resolvable:$true] %s110
          %116 = dma.hbm_to_vmem [thread:$0]  %s109, 2048, %s111, [#allocation6], 128, 128, 8
        $region16: #{tpu_custom_call.1} parent=11 // pred_fallthru
          _
      $region12: #{tpu_custom_call.1} parent=5 // pred_fallthru
        _
      %p117 = scmp.lt.s32.totalorder %s15, 3
      // Predicated region
      $region17: #{tpu_custom_call.1} parent=5 // pred_check
        %p118 = pneg %p117
      $region18: #{tpu_custom_call.1} parent=5 // pred_check_branch
        %120 = sbr.rel (%p118) target = $region20
      $region19: #{tpu_custom_call.1} parent=5 // pred_region
        // Predicated region
        $region21: #{tpu_custom_call.1} parent=19 // pred_check
          %p121 = pneg %p35
        $region22: #{tpu_custom_call.1} parent=19 // pred_check_branch
          %123 = sbr.rel (%p121) target = $region24
        $region23: #{tpu_custom_call.1} parent=19 // pred_region
          %s124 = sand.u32 %s25, 1
          %s125 = scalar_lea.sflag [#allocation3], %s124
          %s126 = sand.u32 %s25, 1
          %s127 = smul.addr %s126, 128
          %s128 = scalar_lea.vmem [#allocation2], %s127
          %s129 = smul.u32 16, %s15
          %131 = vsyncadd %s125, 0
          %s132 = smul.addr %s129, 8
          %s133 = scalar_lea.hbm %s0, %s132
          %s134 = sshll.u32 %s133, 4
          %s135 = int_to_ptr.hbm [resolvable:$true] %s134
          %s136 = sshll.u32 %s128, 4
          %s137 = int_to_ptr.vmem [resolvable:$true] %s136
          %142 = dma.hbm_to_vmem [thread:$0]  %s135, 2048, %s137, %s125, 128, 128, 8
        $region24: #{tpu_custom_call.1} parent=19 // pred_fallthru
          _
      $region20: #{tpu_custom_call.1} parent=5 // pred_fallthru
        _
      %p143 = scmp.le.s32.totalorder 1, %s15
      %p144 = scmp.lt.s32.totalorder %s15, 4
      %p145 = pnand %p143, %p144
      %p146 = pneg %p145
      // Predicated region
      $region25: #{tpu_custom_call.1} parent=5 // pred_check
        _
      $region26: #{tpu_custom_call.1} parent=5 // pred_check_branch
        %148 = sbr.rel (%p145) target = $region28
      $region27: #{tpu_custom_call.1} parent=5 // pred_region
        %s149 = ssub.s32 %s15, 1
        %s150 = sand.u32 %s28, 1
        %s151 = scalar_lea.sflag [#allocation3], %s150
        %s152 = sand.u32 %s28, 1
        %s153 = smul.addr %s152, 128
        %s154 = scalar_lea.vmem [#allocation2], %s153
        // Predicated region
        $region29: #{tpu_custom_call.1} parent=27 // pred_check
          %p155 = pneg %p41
        $region30: #{tpu_custom_call.1} parent=27 // pred_check_branch
          %157 = sbr.rel (%p155) target = $region32
        $region31: #{tpu_custom_call.1} parent=27 // pred_region
          %159 = dma.done %s151, 2048
        $region32: #{tpu_custom_call.1} parent=27 // pred_fallthru
          _
        // Predicated region
        $region33: #{tpu_custom_call.1} parent=27 // pred_check
          %p160 = pneg %p62
        $region34: #{tpu_custom_call.1} parent=27 // pred_check_branch
          %162 = sbr.rel (%p160) target = $region36
        $region35: #{tpu_custom_call.1} parent=27 // pred_region
          %164 = dma.done [#allocation6], 2048
        $region36: #{tpu_custom_call.1} parent=27 // pred_fallthru
          _
        %s165 = sand.u32 %s28, 1
        %s166 = scalar_lea.sflag [#allocation3], %s165
        %s167 = sand.u32 %s28, 1
        %s168 = smul.addr %s167, 128
        %s169 = scalar_lea.vmem [#allocation2], %s168
        %p170 = pneg %p41
        %p171 = pneg %p38
        %p172 = pneg %p62
        %p173 = pneg %p59
        %p174 = pneg %p88
        %p175 = pneg %p85
        %s176 = sand.u32 %s75, 1
        %s177 = scalar_lea.sflag [#allocation4], %s176
        %s178 = sand.u32 %s75, 1
        %s179 = smul.addr %s178, 64
        %s180 = scalar_lea.vmem [#allocation7], %s179
        %s181 = smul.u32 16, %s20
        %s182 = smul.u32 16, %s20
        %v183 = vld [vmem:[%s154] sm:$0xff]
        %v184 = vld [vmem:[%s154 + $0x8] sm:$0xff]
        %v185 = vld [vmem:[%s154 + $0x10] sm:$0xff]
        %v186 = vld [vmem:[%s154 + $0x18] sm:$0xff]
        %v187 = vld [vmem:[%s154 + $0x20] sm:$0xff]
        %v188 = vld [vmem:[%s154 + $0x28] sm:$0xff]
        %v189 = vld [vmem:[%s154 + $0x30] sm:$0xff]
        %v190 = vld [vmem:[%s154 + $0x38] sm:$0xff]
        %v191 = vld [vmem:[%s154 + $0x40] sm:$0xff]
        %v192 = vld [vmem:[%s154 + $0x48] sm:$0xff]
        %v193 = vld [vmem:[%s154 + $0x50] sm:$0xff]
        %v194 = vld [vmem:[%s154 + $0x58] sm:$0xff]
        %v195 = vld [vmem:[%s154 + $0x60] sm:$0xff]
        %v196 = vld [vmem:[%s154 + $0x68] sm:$0xff]
        %v197 = vld [vmem:[%s154 + $0x70] sm:$0xff]
        %v198 = vld [vmem:[%s154 + $0x78] sm:$0xff]
        %v199 = vpack.c.bf16 %v184, %v183
        %v200 = vpack.c.bf16 %v186, %v185
        %v201 = vpack.c.bf16 %v188, %v187
        %v202 = vpack.c.bf16 %v190, %v189
        %v203 = vpack.c.bf16 %v192, %v191
        %v204 = vpack.c.bf16 %v194, %v193
        %v205 = vpack.c.bf16 %v196, %v195
        %v206 = vpack.c.bf16 %v198, %v197
        %v207 = vld [vmem:[#allocation5] sm:$0xff]
        %v208 = vld [vmem:[#allocation5 + $0x8] sm:$0xff]
        %v209 = vld [vmem:[#allocation5 + $0x10] sm:$0xff]
        %v210 = vld [vmem:[#allocation5 + $0x18] sm:$0xff]
        %v211 = vld [vmem:[#allocation5 + $0x20] sm:$0xff]
        %v212 = vld [vmem:[#allocation5 + $0x28] sm:$0xff]
        %v213 = vld [vmem:[#allocation5 + $0x30] sm:$0xff]
        %v214 = vld [vmem:[#allocation5 + $0x38] sm:$0xff]
        %v215 = vld [vmem:[#allocation5 + $0x40] sm:$0xff]
        %v216 = vld [vmem:[#allocation5 + $0x48] sm:$0xff]
        %v217 = vld [vmem:[#allocation5 + $0x50] sm:$0xff]
        %v218 = vld [vmem:[#allocation5 + $0x58] sm:$0xff]
        %v219 = vld [vmem:[#allocation5 + $0x60] sm:$0xff]
        %v220 = vld [vmem:[#allocation5 + $0x68] sm:$0xff]
        %v221 = vld [vmem:[#allocation5 + $0x70] sm:$0xff]
        %v222 = vld [vmem:[#allocation5 + $0x78] sm:$0xff]
        %v223 = vpack.c.bf16 %v208, %v207
        %v224 = vpack.c.bf16 %v210, %v209
        %v225 = vpack.c.bf16 %v212, %v211
        %v226 = vpack.c.bf16 %v214, %v213
        %v227 = vpack.c.bf16 %v216, %v215
        %v228 = vpack.c.bf16 %v218, %v217
        %v229 = vpack.c.bf16 %v220, %v219
        %v230 = vpack.c.bf16 %v222, %v221
        %231 = vmatpush.bf16.msra.mxu0 %v230
        %232 = vmatpush.bf16.msra.mxu0 %v229
        %233 = vmatpush.bf16.msra.mxu0 %v228
        %234 = vmatpush.bf16.msra.mxu0 %v227
        %235 = vmatpush.bf16.msra.mxu0 %v226
        %236 = vmatpush.bf16.msra.mxu0 %v225
        %237 = vmatpush.bf16.msra.mxu0 %v224
        %238 = vmatpush.bf16.msra.mxu0 %v223
        %239 = vmatmul.bf16.gmra.mxu0 %v199
        %v240 = vpop.f32.mrf.mxu0
        %v241 = vadd.f32 0.0, %v240
        %v242 = vpop.f32.mrf.mxu0
        %v243 = vadd.f32 0.0, %v242
        %244 = vmatmul.bf16.gmra.mxu0 %v200
        %v245 = vpop.f32.mrf.mxu0
        %v246 = vadd.f32 0.0, %v245
        %v247 = vpop.f32.mrf.mxu0
        %v248 = vadd.f32 0.0, %v247
        %249 = vmatmul.bf16.gmra.mxu0 %v201
        %v250 = vpop.f32.mrf.mxu0
        %v251 = vadd.f32 0.0, %v250
        %v252 = vpop.f32.mrf.mxu0
        %v253 = vadd.f32 0.0, %v252
        %254 = vmatmul.bf16.gmra.mxu0 %v202
        %v255 = vpop.f32.mrf.mxu0
        %v256 = vadd.f32 0.0, %v255
        %v257 = vpop.f32.mrf.mxu0
        %v258 = vadd.f32 0.0, %v257
        %259 = vmatmul.bf16.gmra.mxu0 %v203
        %v260 = vpop.f32.mrf.mxu0
        %v261 = vadd.f32 0.0, %v260
        %v262 = vpop.f32.mrf.mxu0
        %v263 = vadd.f32 0.0, %v262
        %264 = vmatmul.bf16.gmra.mxu0 %v204
        %v265 = vpop.f32.mrf.mxu0
        %v266 = vadd.f32 0.0, %v265
        %v267 = vpop.f32.mrf.mxu0
        %v268 = vadd.f32 0.0, %v267
        %269 = vmatmul.bf16.gmra.mxu0 %v205
        %v270 = vpop.f32.mrf.mxu0
        %v271 = vadd.f32 0.0, %v270
        %v272 = vpop.f32.mrf.mxu0
        %v273 = vadd.f32 0.0, %v272
        %274 = vmatmul.bf16.gmra.mxu0 %v206
        %v275 = vpop.f32.mrf.mxu0
        %v276 = vadd.f32 0.0, %v275
        %v277 = vpop.f32.mrf.mxu0
        %v278 = vadd.f32 0.0, %v277
        %279 = vdwg.mxu0
        %v280 = vpack.c.bf16 %v241, %v241
        %v281 = vpack.c.bf16 %v243, %v243
        %v282 = vpack.c.bf16 %v246, %v246
        %v283 = vpack.c.bf16 %v248, %v248
        %v284 = vpack.c.bf16 %v251, %v251
        %v285 = vpack.c.bf16 %v253, %v253
        %v286 = vpack.c.bf16 %v256, %v256
        %v287 = vpack.c.bf16 %v258, %v258
        %v288 = vpack.c.bf16 %v261, %v261
        %v289 = vpack.c.bf16 %v263, %v263
        %v290 = vpack.c.bf16 %v266, %v266
        %v291 = vpack.c.bf16 %v268, %v268
        %v292 = vpack.c.bf16 %v271, %v271
        %v293 = vpack.c.bf16 %v273, %v273
        %v294 = vpack.c.bf16 %v276, %v276
        %v295 = vpack.c.bf16 %v278, %v278
        %296 = vst [vmem:[%s180] sm:$0xf] %v280
        %297 = vst [vmem:[%s180 + $0x4] sm:$0xf] %v281
        %298 = vst [vmem:[%s180 + $0x8] sm:$0xf] %v282
        %299 = vst [vmem:[%s180 + $0xc] sm:$0xf] %v283
        %300 = vst [vmem:[%s180 + $0x10] sm:$0xf] %v284
        %301 = vst [vmem:[%s180 + $0x14] sm:$0xf] %v285
        %302 = vst [vmem:[%s180 + $0x18] sm:$0xf] %v286
        %303 = vst [vmem:[%s180 + $0x1c] sm:$0xf] %v287
        %304 = vst [vmem:[%s180 + $0x20] sm:$0xf] %v288
        %305 = vst [vmem:[%s180 + $0x24] sm:$0xf] %v289
        %306 = vst [vmem:[%s180 + $0x28] sm:$0xf] %v290
        %307 = vst [vmem:[%s180 + $0x2c] sm:$0xf] %v291
        %308 = vst [vmem:[%s180 + $0x30] sm:$0xf] %v292
        %309 = vst [vmem:[%s180 + $0x34] sm:$0xf] %v293
        %310 = vst [vmem:[%s180 + $0x38] sm:$0xf] %v294
        %311 = vst [vmem:[%s180 + $0x3c] sm:$0xf] %v295
        %s312 = sand.u32 %s75, 1
        %s313 = scalar_lea.sflag [#allocation4], %s312
        %s314 = sand.u32 %s75, 1
        %s315 = smul.addr %s314, 64
        %s316 = scalar_lea.vmem [#allocation7], %s315
        // Predicated region
        $region37: #{tpu_custom_call.1} parent=27 // pred_check
          %p317 = pneg %p85
        $region38: #{tpu_custom_call.1} parent=27 // pred_check_branch
          %319 = sbr.rel (%p317) target = $region40
        $region39: #{tpu_custom_call.1} parent=27 // pred_region
          %s320 = smul.u32 16, %s20
          %322 = vsyncadd %s313, 0
          %s323 = smul.addr %s320, 4
          %s324 = scalar_lea.hbm %s2, %s323
          %s325 = sshll.u32 %s316, 4
          %s326 = int_to_ptr.vmem [resolvable:$true] %s325
          %s327 = sshll.u32 %s324, 4
          %s328 = int_to_ptr.hbm [resolvable:$true] %s327
          %333 = dma.vmem_to_hbm [thread:$0]  %s326, 1024, %s328, %s313, 64, 64, 4
        $region40: #{tpu_custom_call.1} parent=27 // pred_fallthru
          _
      $region28: #{tpu_custom_call.1} parent=5 // pred_fallthru
        _
      %p334 = scmp.le.s32.totalorder 2, %s15
      // Predicated region
      $region41: #{tpu_custom_call.1} parent=5 // pred_check
        %p335 = pneg %p334
      $region42: #{tpu_custom_call.1} parent=5 // pred_check_branch
        %337 = sbr.rel (%p335) target = $region44
      $region43: #{tpu_custom_call.1} parent=5 // pred_region
        %s338 = ssub.s32 %s15, 2
        // Predicated region
        $region45: #{tpu_custom_call.1} parent=43 // pred_check
          %p339 = pneg %p91
        $region46: #{tpu_custom_call.1} parent=43 // pred_check_branch
          %341 = sbr.rel (%p339) target = $region48
        $region47: #{tpu_custom_call.1} parent=43 // pred_region
          %s342 = sand.u32 %s76, 1
          %s343 = scalar_lea.sflag [#allocation4], %s342
          %s344 = sand.u32 %s76, 1
          %s345 = smul.addr %s344, 64
          %s346 = scalar_lea.vmem [#allocation7], %s345
          %348 = dma.done %s343, 1024
        $region48: #{tpu_custom_call.1} parent=43 // pred_fallthru
          _
      $region44: #{tpu_custom_call.1} parent=5 // pred_fallthru
        _
    $region6: #{tpu_custom_call.1} parent=1 // loop_footer
      %s19 = sadd.s32 1, %s15
    $region7: #{tpu_custom_call.1} parent=1 // loop_footer_branch
      %14 = sbr.rel target = $region3
    $region8: #{tpu_custom_call.1} parent=1 // loop_exit
      _
    %349 = vsyncpa [#allocation3], 1
    %s350 = scalar_lea.sflag [#allocation3], 1
    %351 = vsyncpa %s350, 1
    %352 = vsyncpa [#allocation6], 1
    %353 = vsyncpa [#allocation4], 1
    %s354 = scalar_lea.sflag [#allocation4], 1
    %355 = vsyncpa %s354, 1

</llo_original>
